<compile_context>
chip_gen: v6e
topology: v6e:2x2x1
jax: 0.10.0
libtpu: 0.0.40
codegen_flags: <defaults>
</compile_context>

<pallas_src>
import functools

import jax
import jax.numpy as jnp
from jax import lax
from jax.experimental import pallas as pl
from jax.experimental.pallas import tpu as pltpu

_MiB = 1024 * 1024


def _round_up(x, m):
    return (x + m - 1) // m * m


def _vmem_limit_bytes(per_step_tile_bytes, floor=32 * _MiB, cap=64 * _MiB):
    # Inputs/outputs are double-buffered by the BlockSpec pipeline.
    need = 2 * per_step_tile_bytes + 4 * _MiB
    return int(min(cap, max(floor, need)))


# ----------------------------------------------------------------------------
# Kernels
# ----------------------------------------------------------------------------
def _supcon_mask_kernel(a_ref, ct_ref, m_ref, cnt_ref, out_ref,
                        m_sc, s_sc, p_sc, rs_sc,
                        *, inv_t, neg_t_over_base, n_valid):
    """SupCon 'mask' branch, one (anchor tile i, contrast tile j) grid step.

    a_ref  : (TB, C_pad)  bf16 anchor features (resident across j)
    ct_ref : (C_pad, TN)  bf16 transposed contrast features (streamed over j)
    m_ref  : (TB, TN)     bf16 positive mask, diagonal/padding already zeroed
    cnt_ref: (TB, 1)      f32 per-anchor positive counts (precomputed)
    out    : (TB, 1)      f32 per-anchor loss, written on the last j tile
    scratch: (TB, 1) f32  running max, running exp-sum, pos-weighted logit sum,
                          per-step row-sum staging buffer.
    """
    i = pl.program_id(0)
    j = pl.program_id(1)
    nj = pl.num_programs(1)
    tb, tn = m_ref.shape

    @pl.when(j == 0)
    def _():
        m_sc[...] = jnp.full((tb, 1), -jnp.inf, jnp.float32)
        s_sc[...] = jnp.zeros((tb, 1), jnp.float32)
        p_sc[...] = jnp.zeros((tb, 1), jnp.float32)

    # Plain (TB,C)x(C,TN) MXU matmul in bf16, f32 accumulation; 1/T folded in.
    adc = jnp.dot(a_ref[...], ct_ref[...],
                  preferred_element_type=jnp.float32) * inv_t      # (TB,TN) f32

    # Online max over the raw tile.  This includes the diagonal (matches torch)
    # and the zero-padded columns (stability-only; they are excluded from the
    # exp-sum below, and exp(x - m_new) <= 1 always holds).
    m_new = jnp.maximum(m_sc[...], jnp.max(adc, axis=1, keepdims=True))
    e = jnp.exp(adc - m_new)                                       # (TB,TN) f32

    # Default path (vast majority of tiles): no masking work at all.
    rs_sc[...] = jnp.sum(e, axis=1, keepdims=True)

    # Correction path: tiles that contain the self-contrast diagonal, and (if
    # N is not a multiple of TN) the last tile with zero-padded columns.
    row_lo = i * tb
    col_lo = j * tn
    overlap = jnp.logical_and(row_lo < col_lo + tn, col_lo < row_lo + tb)
    has_col_pad = (n_valid % tn) != 0  # static
    needs_fix = jnp.logical_or(overlap, j == nj - 1) if has_col_pad else overlap

    @pl.when(needs_fix)
    def _():
        rows = lax.broadcasted_iota(jnp.int32, (tb, tn), 0) + row_lo
        cols = lax.broadcasted_iota(jnp.int32, (tb, tn), 1) + col_lo
        keep = rows != cols
        if has_col_pad:
            keep = jnp.logical_and(keep, cols < n_valid)
        rs_sc[...] = jnp.sum(jnp.where(keep, e, 0.0), axis=1, keepdims=True)

    alpha = jnp.exp(m_sc[...] - m_new)
    s_sc[...] = alpha * s_sc[...] + rs_sc[...]
    # Positive-weighted logit sum; m_ref is already zero on the diagonal and on
    # padded columns, and adc is finite everywhere, so no extra masking needed.
    p_sc[...] = p_sc[...] + jnp.sum(m_ref[...].astype(jnp.float32) * adc,
                                    axis=1, keepdims=True)
    m_sc[...] = m_new

    @pl.when(j == nj - 1)
    def _():
        cnt = cnt_ref[...]
        # sum(pos * log_prob) = p - cnt*m - cnt*log(sum_exp_shifted + 1e-12)
        log_denom = m_sc[...] + jnp.log(s_sc[...] + 1e-12)
        mean_log_prob_pos = (p_sc[...] - cnt * log_denom) / cnt
        out_ref[...] = neg_t_over_base * mean_log_prob_pos


def _supcon_infonce_kernel(lpos_ref, q_ref, qt_ref, out_ref,
                           m_sc, s_sc, rs_sc, *, inv_t, k_valid):
    """SupCon 'no-mask' (MoCo/InfoNCE) branch, one (q tile i, queue tile j) step.

    lpos_ref : (TB, 1)      f32 positive logits (q.k)/T, precomputed in XLA
    q_ref    : (TB, C_pad)  bf16 query features (resident across j)
    qt_ref   : (C_pad, TK)  bf16 transposed queue tile (streamed over j)
    out      : (TB, 1)      f32 per-anchor cross-entropy loss (label 0)
    """
    j = pl.program_id(1)
    nj = pl.num_programs(1)
    tb = q_ref.shape[0]
    tk = qt_ref.shape[1]

    @pl.when(j == 0)
    def _():
        m_sc[...] = lpos_ref[...]                 # LSE seeded with the positive
        s_sc[...] = jnp.ones((tb, 1), jnp.float32)

    l_neg = jnp.dot(q_ref[...], qt_ref[...],
                    preferred_element_type=jnp.float32) * inv_t    # (TB,TK) f32

    m_new = jnp.maximum(m_sc[...], jnp.max(l_neg, axis=1, keepdims=True))
    e = jnp.exp(l_neg - m_new)
    rs_sc[...] = jnp.sum(e, axis=1, keepdims=True)

    if (k_valid % tk) != 0:                       # static: only if K is padded
        @pl.when(j == nj - 1)
        def _():
            cols = lax.broadcasted_iota(jnp.int32, (tb, tk), 1) + j * tk
            rs_sc[...] = jnp.sum(jnp.where(cols < k_valid, e, 0.0),
                                 axis=1, keepdims=True)

    alpha = jnp.exp(m_sc[...] - m_new)
    s_sc[...] = alpha * s_sc[...] + rs_sc[...]
    m_sc[...] = m_new

    @pl.when(j == nj - 1)
    def _():
        lse = m_sc[...] + jnp.log(s_sc[...])
        out_ref[...] = lse - lpos_ref[...]        # cross-entropy vs label 0


# ----------------------------------------------------------------------------
# Wrapper (mirrors SupConLoss.forward semantics)
# ----------------------------------------------------------------------------
class SupConLossPallas:
    def __init__(self, temperature=0.07, base_temperature=0.07,
                 compute_dtype=jnp.bfloat16):
        self.temperature = float(temperature)
        self.base_temperature = float(base_temperature)
        self.compute_dtype = compute_dtype       # MXU operand dtype (f32 acc)

    def _feat_dtype(self, features):
        # Low-precision inputs are kept as-is; f32/f64 are cast to bf16 for the
        # streamed matmul operands (accumulation stays f32 on the MXU).
        if features.dtype in (jnp.bfloat16, jnp.float16):
            return features.dtype
        return self.compute_dtype

    # -------------------------- mask branch --------------------------------
    def _mask_branch(self, features, mask, batch_size):
        N, C = features.shape
        B, Nm = mask.shape
        assert Nm == N and batch_size == B, "mask must be (batch_size, N)"

        cd = self._feat_dtype(features)
        fb = jnp.dtype(cd).itemsize
        mask_dtype = jnp.bfloat16                # binary masks are exact in bf16
        mb = 2

        TB = min(256, _round_up(B, 16))          # >=16: bf16 sublane min tile
        TN = min(1024, _round_up(N, 128))
        C_pad = _round_up(C, 128)
        # Keep the double-buffered working set within ~44 MiB (v7x: 64 MiB VMEM).
        while TN > 128 and 2 * (TB * C_pad * fb + C_pad * TN * fb
                                + TB * TN * mb) > 44 * _MiB:
            TN //= 2
        B_pad = _round_up(B, TB)
        N_pad = _round_up(N, TN)

        feats = features.astype(cd)
        anchors_p = jnp.zeros((B_pad, C_pad), cd).at[:B, :C].set(feats[:B])
        contrast_t = jnp.zeros((C_pad, N_pad), cd).at[:C, :N].set(feats.T)

        # torch logits_mask folded in here: zero the self-contrast diagonal.
        mask_lm = mask.at[jnp.arange(B), jnp.arange(B)].set(0.0)
        mask_p = jnp.zeros((B_pad, N_pad), mask_dtype).at[:B, :N].set(
            mask_lm.astype(mask_dtype))
        # Per-anchor positive counts (padded anchors get 0 and are dropped below).
        cnt_p = jnp.zeros((B_pad, 1), jnp.float32).at[:B].set(
            jnp.sum(mask_lm, axis=1, keepdims=True))

        kernel = functools.partial(
            _supcon_mask_kernel,
            inv_t=1.0 / self.temperature,
            neg_t_over_base=-(self.temperature / self.base_temperature),
            n_valid=N)

        gi = B_pad // TB
        per_step = (TB * C_pad * fb + C_pad * TN * fb + TB * TN * mb
                    + 2 * TB * 4)
        cost = pl.CostEstimate(
            flops=2 * B_pad * N_pad * C_pad,
            transcendentals=B_pad * N_pad,
            bytes_accessed=(gi * C_pad * N_pad + B_pad * C_pad) * fb
                           + B_pad * N_pad * mb + 3 * B_pad * 4)

        per_anchor = pl.pallas_call(
            kernel,
            out_shape=jax.ShapeDtypeStruct((B_pad, 1), jnp.float32),
            grid_spec=pltpu.PrefetchScalarGridSpec(
                num_scalar_prefetch=0,
                grid=(gi, N_pad // TN),
                in_specs=[
                    pl.BlockSpec((TB, C_pad), lambda i, j: (i, 0)),
                    pl.BlockSpec((C_pad, TN), lambda i, j: (0, j)),
                    pl.BlockSpec((TB, TN), lambda i, j: (i, j)),
                    pl.BlockSpec((TB, 1), lambda i, j: (i, 0)),
                ],
                out_specs=pl.BlockSpec((TB, 1), lambda i, j: (i, 0)),
                scratch_shapes=[pltpu.VMEM((TB, 1), jnp.float32)] * 4,
            ),
            compiler_params=pltpu.CompilerParams(
                dimension_semantics=("parallel", "arbitrary"),
                vmem_limit_bytes=_vmem_limit_bytes(per_step)),
            cost_estimate=cost,
        )(anchors_p, contrast_t, mask_p, cnt_p)
        # Anchors with zero positives yield NaN, matching the torch reference.
        return jnp.mean(per_anchor[:B, 0])

    # -------------------------- no-mask (InfoNCE) branch --------------------
    def _infonce_branch(self, features, batch_size):
        N, C = features.shape
        B = batch_size
        K = N - 2 * B
        if K <= 0:
            # torch: cross_entropy on (B, 1) logits with label 0 -> exactly 0.
            return jnp.zeros((), jnp.float32)

        cd = self._feat_dtype(features)
        fb = jnp.dtype(cd).itemsize

        TB = min(256, _round_up(B, 16))
        TK = min(1024, _round_up(K, 128))
        C_pad = _round_up(C, 128)
        while TK > 128 and 2 * (TB * C_pad * fb + C_pad * TK * fb) > 44 * _MiB:
            TK //= 2
        B_pad = _round_up(B, TB)
        K_pad = _round_up(K, TK)

        feats = features.astype(cd)
        q = feats[:B]
        k = feats[B:2 * B]
        q_p = jnp.zeros((B_pad, C_pad), cd).at[:B, :C].set(q)
        queue_t = jnp.zeros((C_pad, K_pad), cd).at[:C, :K].set(feats[2 * B:].T)
        # Positive logits computed once in XLA (tiny BxC reduce), scaled by 1/T.
        lpos = jnp.sum(q.astype(jnp.float32) * k.astype(jnp.float32),
                       axis=1, keepdims=True) * (1.0 / self.temperature)
        lpos_p = jnp.zeros((B_pad, 1), jnp.float32).at[:B].set(lpos)

        kernel = functools.partial(
            _supcon_infonce_kernel, inv_t=1.0 / self.temperature, k_valid=K)

        gi = B_pad // TB
        per_step = TB * C_pad * fb + C_pad * TK * fb + 3 * TB * 4
        cost = pl.CostEstimate(
            flops=2 * B_pad * K_pad * C_pad,
            transcendentals=B_pad * K_pad,
            bytes_accessed=(gi * C_pad * K_pad + B_pad * C_pad) * fb
                           + 3 * B_pad * 4)

        per_anchor = pl.pallas_call(
            kernel,
            out_shape=jax.ShapeDtypeStruct((B_pad, 1), jnp.float32),
            grid_spec=pltpu.PrefetchScalarGridSpec(
                num_scalar_prefetch=0,
                grid=(gi, K_pad // TK),
                in_specs=[
                    pl.BlockSpec((TB, 1), lambda i, j: (i, 0)),
                    pl.BlockSpec((TB, C_pad), lambda i, j: (i, 0)),
                    pl.BlockSpec((C_pad, TK), lambda i, j: (0, j)),
                ],
                out_specs=pl.BlockSpec((TB, 1), lambda i, j: (i, 0)),
                scratch_shapes=[pltpu.VMEM((TB, 1), jnp.float32)] * 3,
            ),
            compiler_params=pltpu.CompilerParams(
                dimension_semantics=("parallel", "arbitrary"),
                vmem_limit_bytes=_vmem_limit_bytes(per_step)),
            cost_estimate=cost,
        )(lpos_p, q_p, queue_t)
        return jnp.mean(per_anchor[:B, 0])

    def __call__(self, features, mask=None, batch_size=-1):
        features = jnp.asarray(features)
        if mask is not None:
            return self._mask_branch(features, jnp.asarray(mask, jnp.float32),
                                     int(batch_size))
        return self._infonce_branch(features, int(batch_size))


# ----------------------------------------------------------------------------
# Pure-JAX references (sanity check)
# ----------------------------------------------------------------------------
def _ref_mask(features, mask, batch_size, T, base_T):
    B, N = mask.shape
    adc = (features[:batch_size] @ features.T) / T
    logits = adc - jnp.max(adc, axis=1, keepdims=True)
    logits_mask = jnp.ones_like(mask).at[jnp.arange(B), jnp.arange(B)].set(0.0)
    m = mask * logits_mask
    exp_logits = jnp.exp(logits) * logits_mask
    log_prob = logits - jnp.log(jnp.sum(exp_logits, axis=1, keepdims=True) + 1e-12)
    mlpp = jnp.sum(m * log_prob, axis=1) / jnp.sum(m, axis=1)
    return jnp.mean(-(T / base_T) * mlpp)


def _ref_infonce(features, batch_size, T):
    q = features[:batch_size]
    k = features[batch_size:2 * batch_size]
    queue = features[2 * batch_size:]
    l_pos = jnp.sum(q * k, axis=1, keepdims=True)
    l_neg = q @ queue.T
    logits = jnp.concatenate([l_pos, l_neg], axis=1) / T
    lse = jax.nn.logsumexp(logits, axis=1)
    return jnp.mean(lse - logits[:, 0])


# ----------------------------------------------------------------------------
if __name__ == "__main__":
    key = jax.random.PRNGKey(0)
    k1, _ = jax.random.split(key)

    N, C, B = 8, 32, 2  # 8 features of dim 32, 2 anchors (=> 4 queue entries)
    feats = jax.random.normal(k1, (N, C), dtype=jnp.float32)
    feats = feats / jnp.linalg.norm(feats, axis=1, keepdims=True)

    # Deterministic label-derived positive mask (B, N); every anchor has >=1 positive.
    labels_all = jnp.array([0, 1, 0, 1, 0, 1, 0, 1], dtype=jnp.int32)
    mask = (labels_all[:B, None] == labels_all[None, :]).astype(jnp.float32)

    loss_fn = SupConLossPallas(temperature=0.07, base_temperature=0.07)

    # mask branch
    loss_mask = loss_fn(feats, mask=mask, batch_size=B)
    # no-mask (InfoNCE) branch: features laid out as [q(B); k(B); queue(N-2B)]
    loss_nce = loss_fn(feats, mask=None, batch_size=B)
    jax.block_until_ready((loss_mask, loss_nce))

    # References computed on the same bf16-rounded features the kernels consume.
    feats_ref = feats.astype(jnp.bfloat16).astype(jnp.float32)
    ref_m = _ref_mask(feats_ref, mask, B, 0.07, 0.07)
    ref_n = _ref_infonce(feats_ref, B, 0.07)
    assert jnp.allclose(loss_mask, ref_m, rtol=2e-3, atol=2e-3), (loss_mask, ref_m)
    assert jnp.allclose(loss_nce, ref_n, rtol=2e-3, atol=2e-3), (loss_nce, ref_n)
    assert jnp.isfinite(loss_mask) and jnp.isfinite(loss_nce)

    print("KERNEL_OK")
</pallas_src>

<mosaic_0001>
module attributes {stable_mosaic.version = 11 : i64} {
  func.func @_supcon_mask_kernel(%arg0: i32, %arg1: i32, %arg2: memref<16x128xbf16, #tpu.memory_space<vmem>>, %arg3: memref<128x128xbf16, #tpu.memory_space<vmem>>, %arg4: memref<16x128xbf16, #tpu.memory_space<vmem>>, %arg5: memref<16x1xf32, #tpu.memory_space<vmem>>, %arg6: memref<16x1xf32, #tpu.memory_space<vmem>>, %arg7: memref<16x1xf32, #tpu.memory_space<vmem>>, %arg8: memref<16x1xf32, #tpu.memory_space<vmem>>, %arg9: memref<16x1xf32, #tpu.memory_space<vmem>>, %arg10: memref<16x1xf32, #tpu.memory_space<vmem>>) attributes {dimension_semantics = [#tpu.dimension_semantics<parallel>, #tpu.dimension_semantics<arbitrary>], iteration_bounds = array<i64: 1, 1>, scalar_prefetch = 0 : i64, scratch_operands = 4 : i64, tpu.core_type = #tpu.core_type<tc>, window_params = [{transform_indices = @transform_0, window_bounds = array<i64: 16, 128>}, {transform_indices = @transform_1, window_bounds = array<i64: 128, 128>}, {transform_indices = @transform_2, window_bounds = array<i64: 16, 128>}, {transform_indices = @transform_3, window_bounds = array<i64: 16, 1>}, {transform_indices = @transform_4, window_bounds = array<i64: 16, 1>}]} {
    %c0_i32 = arith.constant 0 : i32
    %0 = arith.cmpi eq, %arg1, %c0_i32 : i32
    %1 = arith.extui %0 : i1 to i32
    %c0_i32_0 = arith.constant 0 : i32
    %2 = arith.cmpi ne, %1, %c0_i32_0 : i32
    scf.if %2 {
      %cst_34 = arith.constant 0xFF800000 : f32
      %49 = vector.broadcast %cst_34 : f32 to vector<16x1xf32>
      %c0_35 = arith.constant 0 : index
      %c0_36 = arith.constant 0 : index
      %50 = vector.load %arg7[%c0_35, %c0_36] : memref<16x1xf32, #tpu.memory_space<vmem>>, vector<16x1xf32>
      tpu.vector_store %arg7[%c0_35, %c0_36], %49 {strides = array<i32>} : memref<16x1xf32, #tpu.memory_space<vmem>>, vector<16x1xf32>,
      %cst_37 = arith.constant 0.000000e+00 : f32
      %51 = vector.broadcast %cst_37 : f32 to vector<16x1xf32>
      %c0_38 = arith.constant 0 : index
      %c0_39 = arith.constant 0 : index
      %52 = vector.load %arg8[%c0_38, %c0_39] : memref<16x1xf32, #tpu.memory_space<vmem>>, vector<16x1xf32>
      tpu.vector_store %arg8[%c0_38, %c0_39], %51 {strides = array<i32>} : memref<16x1xf32, #tpu.memory_space<vmem>>, vector<16x1xf32>,
      %cst_40 = arith.constant 0.000000e+00 : f32
      %53 = vector.broadcast %cst_40 : f32 to vector<16x1xf32>
      %c0_41 = arith.constant 0 : index
      %c0_42 = arith.constant 0 : index
      %54 = vector.load %arg9[%c0_41, %c0_42] : memref<16x1xf32, #tpu.memory_space<vmem>>, vector<16x1xf32>
      tpu.vector_store %arg9[%c0_41, %c0_42], %53 {strides = array<i32>} : memref<16x1xf32, #tpu.memory_space<vmem>>, vector<16x1xf32>,
    } else {
    }
    %c0 = arith.constant 0 : index
    %c0_1 = arith.constant 0 : index
    %3 = vector.load %arg2[%c0, %c0_1] : memref<16x128xbf16, #tpu.memory_space<vmem>>, vector<16x128xbf16>
    %c0_2 = arith.constant 0 : index
    %c0_3 = arith.constant 0 : index
    %4 = vector.load %arg3[%c0_2, %c0_3] : memref<128x128xbf16, #tpu.memory_space<vmem>>, vector<128x128xbf16>
    %cst = arith.constant dense<0.000000e+00> : vector<16x128xf32>
    %5 = tpu.matmul %3, %4, %cst {dimension_numbers = #tpu.dot_dimension_numbers<[1], [0], [0], [1], [0, 0, 1, 1], [], []>} : vector<16x128xbf16>, vector<128x128xbf16>, vector<16x128xf32> -> vector<16x128xf32>
    %cst_4 = arith.constant 14.2857141 : f32
    %6 = vector.broadcast %cst_4 : f32 to vector<16x128xf32>
    %7 = arith.mulf %5, %6 : vector<16x128xf32>
    %c0_5 = arith.constant 0 : index
    %c0_6 = arith.constant 0 : index
    %8 = vector.load %arg7[%c0_5, %c0_6] : memref<16x1xf32, #tpu.memory_space<vmem>>, vector<16x1xf32>
    %cst_7 = arith.constant dense<0xFF800000> : vector<16xf32>
    %9 = vector.multi_reduction <maximumf>, %7, %cst_7 [1] : vector<16x128xf32> to vector<16xf32>
    %10 = vector.shape_cast %9 : vector<16xf32> to vector<16x1xf32>
    %11 = arith.maximumf %8, %10 : vector<16x1xf32>
    %12 = vector.broadcast %11 : vector<16x1xf32> to vector<16x128xf32>
    %13 = arith.subf %7, %12 : vector<16x128xf32>
    %14 = math.exp %13 : vector<16x128xf32>
    %cst_8 = arith.constant dense<0.000000e+00> : vector<16xf32>
    %15 = vector.multi_reduction <add>, %14, %cst_8 [1] : vector<16x128xf32> to vector<16xf32>
    %16 = vector.shape_cast %15 : vector<16xf32> to vector<16x1xf32>
    %c0_9 = arith.constant 0 : index
    %c0_10 = arith.constant 0 : index
    %17 = vector.load %arg10[%c0_9, %c0_10] : memref<16x1xf32, #tpu.memory_space<vmem>>, vector<16x1xf32>
    tpu.vector_store %arg10[%c0_9, %c0_10], %16 {strides = array<i32>} : memref<16x1xf32, #tpu.memory_space<vmem>>, vector<16x1xf32>,
    %c16_i32 = arith.constant 16 : i32
    %18 = arith.muli %arg0, %c16_i32 : i32
    %c128_i32 = arith.constant 128 : i32
    %19 = arith.muli %arg1, %c128_i32 : i32
    %c128_i32_11 = arith.constant 128 : i32
    %20 = arith.addi %19, %c128_i32_11 : i32
    %21 = arith.cmpi slt, %18, %20 : i32
    %c16_i32_12 = arith.constant 16 : i32
    %22 = arith.addi %18, %c16_i32_12 : i32
    %23 = arith.cmpi slt, %19, %22 : i32
    %24 = arith.andi %21, %23 : i1
    %c0_i32_13 = arith.constant 0 : i32
    %25 = arith.cmpi eq, %arg1, %c0_i32_13 : i32
    %26 = arith.ori %24, %25 : i1
    %27 = arith.extui %26 : i1 to i32
    %c0_i32_14 = arith.constant 0 : i32
    %28 = arith.cmpi ne, %27, %c0_i32_14 : i32
    scf.if %28 {
      %49 = tpu.iota {dimensions = array<i32: 0>} : vector<16x128xi32>
      %50 = vector.broadcast %18 : i32 to vector<16x128xi32>
      %51 = arith.addi %49, %50 : vector<16x128xi32>
      %52 = tpu.iota {dimensions = array<i32: 1>} : vector<16x128xi32>
      %53 = vector.broadcast %19 : i32 to vector<16x128xi32>
      %54 = arith.addi %52, %53 : vector<16x128xi32>
      %55 = arith.cmpi ne, %51, %54 : vector<16x128xi32>
      %c8_i32 = arith.constant 8 : i32
      %56 = vector.broadcast %c8_i32 : i32 to vector<16x128xi32>
      %57 = arith.cmpi slt, %54, %56 : vector<16x128xi32>
      %58 = arith.andi %55, %57 : vector<16x128xi1>
      %cst_34 = arith.constant 0.000000e+00 : f32
      %59 = vector.broadcast %cst_34 : f32 to vector<16x128xf32>
      %60 = arith.select %58, %14, %59 : vector<16x128xi1>, vector<16x128xf32>
      %cst_35 = arith.constant dense<0.000000e+00> : vector<16xf32>
      %61 = vector.multi_reduction <add>, %60, %cst_35 [1] : vector<16x128xf32> to vector<16xf32>
      %62 = vector.shape_cast %61 : vector<16xf32> to vector<16x1xf32>
      %c0_36 = arith.constant 0 : index
      %c0_37 = arith.constant 0 : index
      %63 = vector.load %arg10[%c0_36, %c0_37] : memref<16x1xf32, #tpu.memory_space<vmem>>, vector<16x1xf32>
      tpu.vector_store %arg10[%c0_36, %c0_37], %62 {strides = array<i32>} : memref<16x1xf32, #tpu.memory_space<vmem>>, vector<16x1xf32>,
    } else {
    }
    %c0_15 = arith.constant 0 : index
    %c0_16 = arith.constant 0 : index
    %29 = vector.load %arg7[%c0_15, %c0_16] : memref<16x1xf32, #tpu.memory_space<vmem>>, vector<16x1xf32>
    %30 = arith.subf %29, %11 : vector<16x1xf32>
    %31 = math.exp %30 : vector<16x1xf32>
    %c0_17 = arith.constant 0 : index
    %c0_18 = arith.constant 0 : index
    %32 = vector.load %arg8[%c0_17, %c0_18] : memref<16x1xf32, #tpu.memory_space<vmem>>, vector<16x1xf32>
    %33 = arith.mulf %31, %32 : vector<16x1xf32>
    %c0_19 = arith.constant 0 : index
    %c0_20 = arith.constant 0 : index
    %34 = vector.load %arg10[%c0_19, %c0_20] : memref<16x1xf32, #tpu.memory_space<vmem>>, vector<16x1xf32>
    %35 = arith.addf %33, %34 : vector<16x1xf32>
    %c0_21 = arith.constant 0 : index
    %c0_22 = arith.constant 0 : index
    %36 = vector.load %arg8[%c0_21, %c0_22] : memref<16x1xf32, #tpu.memory_space<vmem>>, vector<16x1xf32>
    tpu.vector_store %arg8[%c0_21, %c0_22], %35 {strides = array<i32>} : memref<16x1xf32, #tpu.memory_space<vmem>>, vector<16x1xf32>,
    %c0_23 = arith.constant 0 : index
    %c0_24 = arith.constant 0 : index
    %37 = vector.load %arg9[%c0_23, %c0_24] : memref<16x1xf32, #tpu.memory_space<vmem>>, vector<16x1xf32>
    %c0_25 = arith.constant 0 : index
    %c0_26 = arith.constant 0 : index
    %38 = vector.load %arg4[%c0_25, %c0_26] : memref<16x128xbf16, #tpu.memory_space<vmem>>, vector<16x128xbf16>
    %39 = arith.extf %38 : vector<16x128xbf16> to vector<16x128xf32>
    %40 = arith.mulf %39, %7 : vector<16x128xf32>
    %cst_27 = arith.constant dense<0.000000e+00> : vector<16xf32>
    %41 = vector.multi_reduction <add>, %40, %cst_27 [1] : vector<16x128xf32> to vector<16xf32>
    %42 = vector.shape_cast %41 : vector<16xf32> to vector<16x1xf32>
    %43 = arith.addf %37, %42 : vector<16x1xf32>
    %c0_28 = arith.constant 0 : index
    %c0_29 = arith.constant 0 : index
    %44 = vector.load %arg9[%c0_28, %c0_29] : memref<16x1xf32, #tpu.memory_space<vmem>>, vector<16x1xf32>
    tpu.vector_store %arg9[%c0_28, %c0_29], %43 {strides = array<i32>} : memref<16x1xf32, #tpu.memory_space<vmem>>, vector<16x1xf32>,
    %c0_30 = arith.constant 0 : index
    %c0_31 = arith.constant 0 : index
    %45 = vector.load %arg7[%c0_30, %c0_31] : memref<16x1xf32, #tpu.memory_space<vmem>>, vector<16x1xf32>
    tpu.vector_store %arg7[%c0_30, %c0_31], %11 {strides = array<i32>} : memref<16x1xf32, #tpu.memory_space<vmem>>, vector<16x1xf32>,
    %c0_i32_32 = arith.constant 0 : i32
    %46 = arith.cmpi eq, %arg1, %c0_i32_32 : i32
    %47 = arith.extui %46 : i1 to i32
    %c0_i32_33 = arith.constant 0 : i32
    %48 = arith.cmpi ne, %47, %c0_i32_33 : i32
    scf.if %48 {
      %c0_34 = arith.constant 0 : index
      %c0_35 = arith.constant 0 : index
      %49 = vector.load %arg5[%c0_34, %c0_35] : memref<16x1xf32, #tpu.memory_space<vmem>>, vector<16x1xf32>
      %c0_36 = arith.constant 0 : index
      %c0_37 = arith.constant 0 : index
      %50 = vector.load %arg7[%c0_36, %c0_37] : memref<16x1xf32, #tpu.memory_space<vmem>>, vector<16x1xf32>
      %c0_38 = arith.constant 0 : index
      %c0_39 = arith.constant 0 : index
      %51 = vector.load %arg8[%c0_38, %c0_39] : memref<16x1xf32, #tpu.memory_space<vmem>>, vector<16x1xf32>
      %cst_40 = arith.constant 9.99999996E-13 : f32
      %52 = vector.broadcast %cst_40 : f32 to vector<16x1xf32>
      %53 = arith.addf %51, %52 : vector<16x1xf32>
      %54 = math.log %53 : vector<16x1xf32>
      %55 = arith.addf %50, %54 : vector<16x1xf32>
      %c0_41 = arith.constant 0 : index
      %c0_42 = arith.constant 0 : index
      %56 = vector.load %arg9[%c0_41, %c0_42] : memref<16x1xf32, #tpu.memory_space<vmem>>, vector<16x1xf32>
      %57 = arith.mulf %49, %55 : vector<16x1xf32>
      %58 = arith.subf %56, %57 : vector<16x1xf32>
      %59 = arith.divf %58, %49 : vector<16x1xf32>
      %cst_43 = arith.constant -1.000000e+00 : f32
      %60 = vector.broadcast %cst_43 : f32 to vector<16x1xf32>
      %61 = arith.mulf %60, %59 : vector<16x1xf32>
      %c0_44 = arith.constant 0 : index
      %c0_45 = arith.constant 0 : index
      %62 = vector.load %arg6[%c0_44, %c0_45] : memref<16x1xf32, #tpu.memory_space<vmem>>, vector<16x1xf32>
      tpu.vector_store %arg6[%c0_44, %c0_45], %61 {strides = array<i32>} : memref<16x1xf32, #tpu.memory_space<vmem>>, vector<16x1xf32>,
    } else {
    }
    return
  }
  func.func @transform_0(%arg0: i32, %arg1: i32) -> (i32, i32) {
    %c0_i32 = arith.constant 0 : i32
    %c0_i32_0 = arith.constant 0 : i32
    return %arg0, %c0_i32 : i32, i32
  }
  func.func @transform_1(%arg0: i32, %arg1: i32) -> (i32, i32) {
    %c0_i32 = arith.constant 0 : i32
    %c0_i32_0 = arith.constant 0 : i32
    return %c0_i32, %arg1 : i32, i32
  }
  func.func @transform_2(%arg0: i32, %arg1: i32) -> (i32, i32) {
    %c0_i32 = arith.constant 0 : i32
    return %arg0, %arg1 : i32, i32
  }
  func.func @transform_3(%arg0: i32, %arg1: i32) -> (i32, i32) {
    %c0_i32 = arith.constant 0 : i32
    %c0_i32_0 = arith.constant 0 : i32
    return %arg0, %c0_i32 : i32, i32
  }
  func.func @transform_4(%arg0: i32, %arg1: i32) -> (i32, i32) {
    %c0_i32 = arith.constant 0 : i32
    %c0_i32_0 = arith.constant 0 : i32
    return %arg0, %c0_i32 : i32, i32
  }
}

</mosaic_0001>

<llo_original>
// kernel: tpu_custom_call.1
$region0: #{tpu_custom_call.1}
  #allocation0 [shape = 'u32[]', space=smem, size = 0x4, offset = 0x4, fixed_abs, tag = 'smem constant byte address 0x4 - core index']
  #allocation1 [shape = 'u32[144,128]{1,0:T(1,128)}', space=vmem, size = 0x12000, scoped, tag = 'internal scratch']
  #allocation2 [shape = 'f32[16,1]{1,0:T(8,128)}', space=vmem, size = 0x2000, scoped, tag = 'scratch operand']
  #allocation3 [shape = 'f32[16,1]{1,0:T(8,128)}', space=vmem, size = 0x2000, scoped, tag = 'scratch operand']
  #allocation4 [shape = 'f32[16,1]{1,0:T(8,128)}', space=vmem, size = 0x2000, scoped, tag = 'scratch operand']
  #allocation5 [shape = 'f32[16,1]{1,0:T(8,128)}', space=vmem, size = 0x2000, scoped, tag = 'scratch operand']
  %s0 = inlined_call_operand.vmem [shape: bf16[16,128], index: 0, kind: input, shape index: {}]
  %s1 = inlined_call_operand.hbm [shape: bf16[128,128], index: 1, kind: input, shape index: {}]
  %s2 = inlined_call_operand.vmem [shape: bf16[16,128], index: 2, kind: input, shape index: {}]
  %s3 = inlined_call_operand.vmem [shape: f32[16,1], index: 3, kind: input, shape index: {}]
  %s4 = inlined_call_operand.vmem [shape: f32[16,1], index: 4, kind: output, shape index: {}]
  %s5 = sld [smem:[#allocation0]]
  $region42: #{tpu_custom_call.1} parent=0
    _
  %s7 = ssub.s32 1, %s5
  %s8 = scalar_select 0, %s7, %s5
  $region1: #{tpu_custom_call.1} parent=0
    #allocation6 [shape = 'u8[32768]{0}', space=vmem, size = 0x8000, scoped, tag = 'input window, operand 1, single buffered']
    #allocation7 [shape = 's32[1]{0}', space=sflag, size = 0x4, scoped, tag = 'scoped memory for tpu_custom_call.1']
    %9 = vsyncpa [#allocation7], 0
    // Predicated region
    $region2: #{tpu_custom_call.1} parent=1 // pred_check
      _
    $region3: #{tpu_custom_call.1} parent=1 // pred_check_branch
      %11 = sbr.rel (0) target = $region5
    $region4: #{tpu_custom_call.1} parent=1 // pred_region
      _
    $region5: #{tpu_custom_call.1} parent=1 // pred_fallthru
      _
    // Predicated region
    $region6: #{tpu_custom_call.1} parent=1 // pred_check
      _
    $region7: #{tpu_custom_call.1} parent=1 // pred_check_branch
      %13 = sbr.rel (0) target = $region9
    $region8: #{tpu_custom_call.1} parent=1 // pred_region
      %s15 = ssub.s32 1024, 1024
      %16 = vsyncadd [#allocation7], %s15
      %s17 = sshll.u32 [#allocation6], 4
      %s18 = int_to_ptr.vmem [resolvable:$true] %s17
      %23 = dma.hbm_to_vmem [thread:$0]  %s1, 1024, %s18, [#allocation7], 64, 64, 4
    $region9: #{tpu_custom_call.1} parent=1 // pred_fallthru
      _
    // Predicated region
    $region10: #{tpu_custom_call.1} parent=1 // pred_check
      _
    $region11: #{tpu_custom_call.1} parent=1 // pred_check_branch
      %25 = sbr.rel (0) target = $region13
    $region12: #{tpu_custom_call.1} parent=1 // pred_region
      _
    $region13: #{tpu_custom_call.1} parent=1 // pred_fallthru
      _
    // Predicated region
    $region14: #{tpu_custom_call.1} parent=1 // pred_check
      _
    $region15: #{tpu_custom_call.1} parent=1 // pred_check_branch
      %27 = sbr.rel (0) target = $region17
    $region16: #{tpu_custom_call.1} parent=1 // pred_region
      _
    $region17: #{tpu_custom_call.1} parent=1 // pred_fallthru
      _
    // Predicated region
    $region18: #{tpu_custom_call.1} parent=1 // pred_check
      _
    $region19: #{tpu_custom_call.1} parent=1 // pred_check_branch
      %29 = sbr.rel (0) target = $region21
    $region20: #{tpu_custom_call.1} parent=1 // pred_region
      %30 = dma.done [#allocation7], 1024
    $region21: #{tpu_custom_call.1} parent=1 // pred_fallthru
      _
    %p32 = scmp.eq.s32.totalorder 0, 0
    // Predicated region
    $region22: #{tpu_custom_call.1} parent=1 // pred_check
      %p33 = pneg %p32
    $region23: #{tpu_custom_call.1} parent=1 // pred_check_branch
      %35 = sbr.rel (%p33) target = $region25
    $region24: #{tpu_custom_call.1} parent=1 // pred_region
      %vm36 = vcmask 7168
      %37 = vst.msk [vmem:[#allocation2] sm:$0xff] %vm36, -inf
      %38 = vst.msk [vmem:[#allocation2 + $0x8] sm:$0xff] %vm36, -inf
      %39 = vst.msk [vmem:[#allocation3] sm:$0xff] %vm36, 0.0
      %40 = vst.msk [vmem:[#allocation3 + $0x8] sm:$0xff] %vm36, 0.0
      %41 = vst.msk [vmem:[#allocation4] sm:$0xff] %vm36, 0.0
      %42 = vst.msk [vmem:[#allocation4 + $0x8] sm:$0xff] %vm36, 0.0
    $region25: #{tpu_custom_call.1} parent=1 // pred_fallthru
      _
    %v43 = vld [vmem:[%s0] sm:$0xf]
    %v44 = vld [vmem:[%s0 + $0x4] sm:$0xf]
    %v45 = vld [vmem:[#allocation6] sm:$0xf]
    %v46 = vld [vmem:[#allocation6 + $0x4] sm:$0xf]
    %v47 = vld [vmem:[#allocation6 + $0x8] sm:$0xf]
    %v48 = vld [vmem:[#allocation6 + $0xc] sm:$0xf]
    %v49 = vld [vmem:[#allocation6 + $0x10] sm:$0xf]
    %v50 = vld [vmem:[#allocation6 + $0x14] sm:$0xf]
    %v51 = vld [vmem:[#allocation6 + $0x18] sm:$0xf]
    %v52 = vld [vmem:[#allocation6 + $0x1c] sm:$0xf]
    %v53 = vld [vmem:[#allocation6 + $0x20] sm:$0xf]
    %v54 = vld [vmem:[#allocation6 + $0x24] sm:$0xf]
    %v55 = vld [vmem:[#allocation6 + $0x28] sm:$0xf]
    %v56 = vld [vmem:[#allocation6 + $0x2c] sm:$0xf]
    %v57 = vld [vmem:[#allocation6 + $0x30] sm:$0xf]
    %v58 = vld [vmem:[#allocation6 + $0x34] sm:$0xf]
    %v59 = vld [vmem:[#allocation6 + $0x38] sm:$0xf]
    %v60 = vld [vmem:[#allocation6 + $0x3c] sm:$0xf]
    %v63 = vunpack.c.l.b16 %v43
    %v64 = vunpack.c.l.b16 %v44
    %v65 = vpack.c.b16 %v64, %v63
    %v83 = vunpack.c.l.b16 %v45
    %v84 = vunpack.c.l.b16 %v46
    %v85 = vunpack.c.l.b16 %v47
    %v86 = vunpack.c.l.b16 %v48
    %v87 = vunpack.c.l.b16 %v49
    %v88 = vunpack.c.l.b16 %v50
    %v89 = vunpack.c.l.b16 %v51
    %v90 = vunpack.c.l.b16 %v52
    %v91 = vunpack.c.l.b16 %v53
    %v92 = vunpack.c.l.b16 %v54
    %v93 = vunpack.c.l.b16 %v55
    %v94 = vunpack.c.l.b16 %v56
    %v95 = vunpack.c.l.b16 %v57
    %v96 = vunpack.c.l.b16 %v58
    %v97 = vunpack.c.l.b16 %v59
    %v98 = vunpack.c.l.b16 %v60
    %v99 = vpack.c.b16 %v84, %v83
    %v100 = vpack.c.b16 %v86, %v85
    %v101 = vpack.c.b16 %v88, %v87
    %v102 = vpack.c.b16 %v90, %v89
    %v103 = vpack.c.b16 %v92, %v91
    %v104 = vpack.c.b16 %v94, %v93
    %v105 = vpack.c.b16 %v96, %v95
    %v106 = vpack.c.b16 %v98, %v97
    %115 = vmatprep.subr.bf16.mxu0 0
    %116 = vmatpush1.bf16.msra.mxu0 %v106
    %117 = vmatprep.subr.bf16.mxu0 0
    %118 = vmatpush1.bf16.msra.mxu0 %v105
    %119 = vmatprep.subr.bf16.mxu0 0
    %120 = vmatpush1.bf16.msra.mxu0 %v104
    %121 = vmatprep.subr.bf16.mxu0 0
    %122 = vmatpush1.bf16.msra.mxu0 %v103
    %123 = vmatprep.subr.bf16.mxu0 0
    %124 = vmatpush1.bf16.msra.mxu0 %v102
    %125 = vmatprep.subr.bf16.mxu0 0
    %126 = vmatpush1.bf16.msra.mxu0 %v101
    %127 = vmatprep.subr.bf16.mxu0 0
    %128 = vmatpush1.bf16.msra.mxu0 %v100
    %129 = vmatprep.subr.bf16.mxu0 0
    %130 = vmatpush1.bf16.msra.mxu0 %v99
    %131 = vmatprep.subr.bf16.mxu0 0
    %132 = vmatpush2.bf16.msra.mxu0 0
    %133 = vmatprep.subr.bf16.mxu0 0
    %134 = vmatpush2.bf16.msra.mxu0 0
    %135 = vmatprep.subr.bf16.mxu0 0
    %136 = vmatpush2.bf16.msra.mxu0 0
    %137 = vmatprep.subr.bf16.mxu0 0
    %138 = vmatpush2.bf16.msra.mxu0 0
    %139 = vmatprep.subr.bf16.mxu0 0
    %140 = vmatpush2.bf16.msra.mxu0 0
    %141 = vmatprep.subr.bf16.mxu0 0
    %142 = vmatpush2.bf16.msra.mxu0 0
    %143 = vmatprep.subr.bf16.mxu0 0
    %144 = vmatpush2.bf16.msra.mxu0 0
    %145 = vmatprep.subr.bf16.mxu0 0
    %146 = vmatpush2.bf16.msra.mxu0 0
    %147 = vmatprep.mubr.bf16.mxu0 0
    %148 = vmatmul.mubr.bf16.gmra.mxu0 %v65
    %v149 = vpop.f32.mrf.mxu0
    %v150 = vadd.f32 0.0, %v149
    %v151 = vpop.f32.mrf.mxu0
    %v152 = vpop.f32.mrf.mxu0
    %v153 = vadd.f32 0.0, %v152
    %v154 = vpop.f32.mrf.mxu0
    %155 = vdwg.mxu0
    %v156 = vmul.f32 %v150, 14.285714
    %v157 = vmul.f32 %v153, 14.285714
    %v158 = vld [vmem:[#allocation2] sm:$0xff]
    %v159 = vld [vmem:[#allocation2 + $0x8] sm:$0xff]
    %160 = vmax.xlane.f32.xlu0 %v156
    %v161 = vpop.xlane.xlu0 %160
    %162 = vmax.xlane.f32.xlu0 %v157
    %v163 = vpop.xlane.xlu0 %162
    %v164 = vmax.f32 %v158, %v161
    %v165 = vmax.f32 %v159, %v163
    %167 = vset.pattern.permute.xlu0 0
    %168 = vperm.xlu0 %167, %v164
    %v169 = vpop.permute.xlu0 %168
    %172 = vset.pattern.permute.xlu0 0
    %173 = vperm.xlu0 %172, %v165
    %v174 = vpop.permute.xlu0 %173
    %v176 = vsub.f32 %v156, %v169
    %v177 = vsub.f32 %v157, %v174
    %v178 = vmul.f32 %v176, 1.442695
    %v179 = vpow.pop %v178
    %v180 = vmul.f32 %v177, 1.442695
    %v181 = vpow.pop %v180
    %182 = vadd.xlane.f32.xlu0 %v179
    %v183 = vpop.xlane.xlu0 %182
    %184 = vadd.xlane.f32.xlu0 %v181
    %v185 = vpop.xlane.xlu0 %184
    %vm186 = vcmask 7168
    %187 = vst.msk [vmem:[#allocation5] sm:$0xff] %vm186, %v183
    %188 = vst.msk [vmem:[#allocation5 + $0x8] sm:$0xff] %vm186, %v185
    %s189 = smul.u32 0, 16
    %s190 = smul.u32 0, 128
    %s191 = sadd.s32 %s190, 128
    %p192 = scmp.lt.s32.totalorder %s189, %s191
    %s193 = sadd.s32 %s189, 16
    %p194 = scmp.lt.s32.totalorder %s190, %s193
    %p195 = pnand %p192, %p194
    %p196 = pneg %p195
    %p197 = por %p196, %p32
    // Predicated region
    $region26: #{tpu_custom_call.1} parent=1 // pred_check
      %p198 = pneg %p197
    $region27: #{tpu_custom_call.1} parent=1 // pred_check_branch
      %200 = sbr.rel (%p198) target = $region29
    $region28: #{tpu_custom_call.1} parent=1 // pred_region
      %v201 = vlaneseq
      %v202 = vshrl.u32 %v201, 7
      %v203 = vadd.s32 %v202, 8
      %v204 = vstv %s189
      %v205 = vadd.s32 %v202, %v204
      %v206 = vadd.s32 %v203, %v204
      %v207 = vlaneseq
      %v208 = vand.u32 %v207, 127
      %v209 = vstv %s190
      %v210 = vadd.s32 %v208, %v209
      %vm211 = vcmp.ne.s32.totalorder %v205, %v210
      %vm212 = vcmp.ne.s32.totalorder %v206, %v210
      %vm213 = vcmp.lt.s32.totalorder %v210, 8
      %vm214 = vmand %vm211, %vm213
      %vm215 = vmand %vm212, %vm213
      %v216 = vsel %vm214, %v179, 0.0
      %v217 = vsel %vm215, %v181, 0.0
      %218 = vadd.xlane.f32.xlu0 %v216
      %v219 = vpop.xlane.xlu0 %218
      %220 = vadd.xlane.f32.xlu0 %v217
      %v221 = vpop.xlane.xlu0 %220
      %222 = vst.msk [vmem:[#allocation5] sm:$0xff] %vm186, %v219
      %223 = vst.msk [vmem:[#allocation5 + $0x8] sm:$0xff] %vm186, %v221
    $region29: #{tpu_custom_call.1} parent=1 // pred_fallthru
      _
    %v224 = vld [vmem:[#allocation2] sm:$0xff]
    %v225 = vld [vmem:[#allocation2 + $0x8] sm:$0xff]
    %v226 = vsub.f32 %v224, %v164
    %v227 = vsub.f32 %v225, %v165
    %v228 = vmul.f32 %v226, 1.442695
    %v229 = vpow.pop %v228
    %v230 = vmul.f32 %v227, 1.442695
    %v231 = vpow.pop %v230
    %v232 = vld [vmem:[#allocation3] sm:$0xff]
    %v233 = vld [vmem:[#allocation3 + $0x8] sm:$0xff]
    %v234 = vmul.f32 %v229, %v232
    %v235 = vmul.f32 %v231, %v233
    %v236 = vld [vmem:[#allocation5] sm:$0xff]
    %v237 = vld [vmem:[#allocation5 + $0x8] sm:$0xff]
    %v238 = vadd.f32 %v234, %v236
    %v239 = vadd.f32 %v235, %v237
    %240 = vst.msk [vmem:[#allocation3] sm:$0xff] %vm186, %v238
    %241 = vst.msk [vmem:[#allocation3 + $0x8] sm:$0xff] %vm186, %v239
    %v242 = vld [vmem:[#allocation4] sm:$0xff]
    %v243 = vld [vmem:[#allocation4 + $0x8] sm:$0xff]
    %v244 = vld [vmem:[%s2] sm:$0xf]
    %v245 = vld [vmem:[%s2 + $0x4] sm:$0xf]
    %v246 = vunpack.c.l.bf16 %v244
    %v247 = vunpack.c.l.bf16 %v245
    %v248 = vmul.f32 %v246, %v156
    %v249 = vmul.f32 %v247, %v157
    %250 = vadd.xlane.f32.xlu0 %v248
    %v251 = vpop.xlane.xlu0 %250
    %252 = vadd.xlane.f32.xlu0 %v249
    %v253 = vpop.xlane.xlu0 %252
    %v254 = vadd.f32 %v242, %v251
    %v255 = vadd.f32 %v243, %v253
    %256 = vst.msk [vmem:[#allocation4] sm:$0xff] %vm186, %v254
    %257 = vst.msk [vmem:[#allocation4 + $0x8] sm:$0xff] %vm186, %v255
    %258 = vst.msk [vmem:[#allocation2] sm:$0xff] %vm186, %v164
    %259 = vst.msk [vmem:[#allocation2 + $0x8] sm:$0xff] %vm186, %v165
    // Predicated region
    $region30: #{tpu_custom_call.1} parent=1 // pred_check
      %p260 = pneg %p32
    $region31: #{tpu_custom_call.1} parent=1 // pred_check_branch
      %262 = sbr.rel (%p260) target = $region33
    $region32: #{tpu_custom_call.1} parent=1 // pred_region
      %v263 = vld [vmem:[%s3] sm:$0xff]
      %v264 = vld [vmem:[%s3 + $0x8] sm:$0xff]
      %v265 = vld [vmem:[#allocation2] sm:$0xff]
      %v266 = vld [vmem:[#allocation2 + $0x8] sm:$0xff]
      %v267 = vld [vmem:[#allocation3] sm:$0xff]
      %v268 = vld [vmem:[#allocation3 + $0x8] sm:$0xff]
      %v269 = vadd.f32 %v267, 1e-12
      %v270 = vadd.f32 %v268, 1e-12
      %v271 = vlog2.pop %v269
      %v272 = vmul.f32 %v271, 0.6931472
      %v273 = vlog2.pop %v270
      %v274 = vmul.f32 %v273, 0.6931472
      %v275 = vadd.f32 %v265, %v272
      %v276 = vadd.f32 %v266, %v274
      %v277 = vld [vmem:[#allocation4] sm:$0xff]
      %v278 = vld [vmem:[#allocation4 + $0x8] sm:$0xff]
      %v279 = vmul.f32 %v263, %v275
      %v280 = vmul.f32 %v264, %v276
      %v281 = vsub.f32 %v277, %v279
      %v282 = vsub.f32 %v278, %v280
      %v283 = vrcp.pop %v263
      %v284 = vmul.f32 %v281, %v283
      %v285 = vrcp.pop %v264
      %v286 = vmul.f32 %v282, %v285
      %v287 = vmul.f32 %v284, -1.0
      %v288 = vmul.f32 %v286, -1.0
      %289 = vst.msk [vmem:[%s4] sm:$0xff] %vm186, %v287
      %290 = vst.msk [vmem:[%s4 + $0x8] sm:$0xff] %vm186, %v288
    $region33: #{tpu_custom_call.1} parent=1 // pred_fallthru
      _
    // Predicated region
    $region34: #{tpu_custom_call.1} parent=1 // pred_check
      _
    $region35: #{tpu_custom_call.1} parent=1 // pred_check_branch
      %292 = sbr.rel (0) target = $region37
    $region36: #{tpu_custom_call.1} parent=1 // pred_region
      _
    $region37: #{tpu_custom_call.1} parent=1 // pred_fallthru
      _
    // Predicated region
    $region38: #{tpu_custom_call.1} parent=1 // pred_check
      _
    $region39: #{tpu_custom_call.1} parent=1 // pred_check_branch
      %294 = sbr.rel (0) target = $region41
    $region40: #{tpu_custom_call.1} parent=1 // pred_region
      _
    $region41: #{tpu_custom_call.1} parent=1 // pred_fallthru
      _
    %295 = vsyncpa [#allocation7], 1

</llo_original>
